<compile_context>
chip_gen: v6e
topology: v6e:2x2x1
jax: 0.10.0
libtpu: 0.0.40
codegen_flags: <defaults>
</compile_context>

<pallas_src>
import functools

import jax
import jax.numpy as jnp
from jax.experimental import pallas as pl
from jax.experimental.pallas import tpu as pltpu


_INV_SQRT2 = 0.7071067811865476


def _gelu_f32(x):
    # exact (erf-based) GELU, matching torch.nn.functional.gelu default
    return 0.5 * x * (1.0 + jax.lax.erf(x * _INV_SQRT2))


# ---------------------------------------------------------------------------
# Kernels
# ---------------------------------------------------------------------------

def _linear_kernel(x_ref, w_ref, b_ref, o_ref, acc_ref, *, activation):
    """One (tm, tn) output tile of y = act(x @ w + b), accumulated over K."""
    k = pl.program_id(2)

    @pl.when(k == 0)
    def _():
        # initialize the f32 accumulator with the (broadcast) bias
        acc_ref[...] = jnp.broadcast_to(b_ref[...], acc_ref.shape)

    acc_ref[...] += jnp.dot(x_ref[...], w_ref[...],
                            preferred_element_type=jnp.float32)

    @pl.when(k == pl.num_programs(2) - 1)
    def _():
        y = acc_ref[...]
        if activation == "gelu":
            y = _gelu_f32(y)
        o_ref[...] = y.astype(o_ref.dtype)


def _geglu_kernel(x_ref, wh_ref, wg_ref, bh_ref, bg_ref, o_ref,
                  acc_h_ref, acc_g_ref):
    """One (tm, tn) output tile of h * gelu(gate) with two K-accumulated matmuls."""
    k = pl.program_id(2)

    @pl.when(k == 0)
    def _():
        acc_h_ref[...] = jnp.broadcast_to(bh_ref[...], acc_h_ref.shape)
        acc_g_ref[...] = jnp.broadcast_to(bg_ref[...], acc_g_ref.shape)

    x = x_ref[...]
    acc_h_ref[...] += jnp.dot(x, wh_ref[...], preferred_element_type=jnp.float32)
    acc_g_ref[...] += jnp.dot(x, wg_ref[...], preferred_element_type=jnp.float32)

    @pl.when(k == pl.num_programs(2) - 1)
    def _():
        o_ref[...] = (acc_h_ref[...] * _gelu_f32(acc_g_ref[...])).astype(o_ref.dtype)


# ---------------------------------------------------------------------------
# Wrappers
# ---------------------------------------------------------------------------

def _round_up(n, m):
    return ((n + m - 1) // m) * m


def _pick_tile(size, pref, align):
    """Largest tile <= pref that is a multiple of `align` and divides the
    `align`-padded size (padding never exceeds one alignment unit)."""
    padded = _round_up(size, align)
    t = min(_round_up(pref, align), padded)
    while padded % t:
        t -= align
    return t, padded


def _pad2d(a, rows, cols):
    pr = rows - a.shape[0]
    pc = cols - a.shape[1]
    if pr == 0 and pc == 0:
        return a
    return jnp.pad(a, ((0, pr), (0, pc)))


_COMPILER_PARAMS = pltpu.CompilerParams(
    dimension_semantics=("parallel", "parallel", "arbitrary"),
    vmem_limit_bytes=64 * 1024 * 1024,
)


def fused_linear(x, w, b, *, activation=None, tm=256, tn=256, tk=512,
                 compute_dtype=jnp.bfloat16, out_dtype=None):
    """y = activation(x @ w + b).  x: (M, K), w: (K, N), b: (N,)."""
    M, K = x.shape
    Kw, N = w.shape
    assert K == Kw and b.shape == (N,)
    out_dtype = x.dtype if out_dtype is None else out_dtype

    tm, Mp = _pick_tile(M, tm, 8)
    tn, Np = _pick_tile(N, tn, 128)
    tk, Kp = _pick_tile(K, tk, 128)

    xp = _pad2d(x, Mp, Kp).astype(compute_dtype)
    wp = _pad2d(w, Kp, Np).astype(compute_dtype)
    bp = _pad2d(b.reshape(1, N).astype(jnp.float32), 1, Np)

    grid = (Mp // tm, Np // tn, Kp // tk)
    itemsize = jnp.dtype(compute_dtype).itemsize
    cost = pl.CostEstimate(
        flops=2 * Mp * Np * Kp,
        transcendentals=Mp * Np if activation == "gelu" else 0,
        bytes_accessed=(xp.size + wp.size) * itemsize + bp.size * 4
        + Mp * Np * jnp.dtype(out_dtype).itemsize,
    )

    out = pl.pallas_call(
        functools.partial(_linear_kernel, activation=activation),
        out_shape=jax.ShapeDtypeStruct((Mp, Np), out_dtype),
        grid_spec=pltpu.PrefetchScalarGridSpec(
            num_scalar_prefetch=0,
            grid=grid,
            in_specs=[
                pl.BlockSpec((tm, tk), lambda i, j, k: (i, k)),   # x tile
                pl.BlockSpec((tk, tn), lambda i, j, k: (k, j)),   # weight tile
                pl.BlockSpec((1, tn), lambda i, j, k: (0, j)),    # bias tile
            ],
            out_specs=pl.BlockSpec((tm, tn), lambda i, j, k: (i, j)),
            scratch_shapes=[pltpu.VMEM((tm, tn), jnp.float32)],
        ),
        compiler_params=_COMPILER_PARAMS,
        cost_estimate=cost,
    )(xp, wp, bp)
    return out[:M, :N]


def geglu(x, w, b, *, tm=256, tn=256, tk=512,
          compute_dtype=jnp.bfloat16, out_dtype=None):
    """GEGLU: [h | gate] = x @ w + b; y = h * gelu(gate).
    x: (M, K), w: (K, 2*d), b: (2*d,)."""
    M, K = x.shape
    Kw, two_d = w.shape
    assert K == Kw and two_d % 2 == 0 and b.shape == (two_d,)
    d = two_d // 2
    out_dtype = x.dtype if out_dtype is None else out_dtype

    tm, Mp = _pick_tile(M, tm, 8)
    tn, Np = _pick_tile(d, tn, 128)
    tk, Kp = _pick_tile(K, tk, 128)

    xp = _pad2d(x, Mp, Kp).astype(compute_dtype)
    # split into contiguous h / gate halves (same invariant as torch chunk(2, -1))
    whp = _pad2d(w[:, :d], Kp, Np).astype(compute_dtype)
    wgp = _pad2d(w[:, d:], Kp, Np).astype(compute_dtype)
    bhp = _pad2d(b[:d].reshape(1, d).astype(jnp.float32), 1, Np)
    bgp = _pad2d(b[d:].reshape(1, d).astype(jnp.float32), 1, Np)

    grid = (Mp // tm, Np // tn, Kp // tk)
    itemsize = jnp.dtype(compute_dtype).itemsize
    cost = pl.CostEstimate(
        flops=4 * Mp * Np * Kp,
        transcendentals=Mp * Np,
        bytes_accessed=(xp.size + whp.size + wgp.size) * itemsize
        + (bhp.size + bgp.size) * 4 + Mp * Np * jnp.dtype(out_dtype).itemsize,
    )

    out = pl.pallas_call(
        _geglu_kernel,
        out_shape=jax.ShapeDtypeStruct((Mp, Np), out_dtype),
        grid_spec=pltpu.PrefetchScalarGridSpec(
            num_scalar_prefetch=0,
            grid=grid,
            in_specs=[
                pl.BlockSpec((tm, tk), lambda i, j, k: (i, k)),   # x tile
                pl.BlockSpec((tk, tn), lambda i, j, k: (k, j)),   # w_h tile
                pl.BlockSpec((tk, tn), lambda i, j, k: (k, j)),   # w_gate tile
                pl.BlockSpec((1, tn), lambda i, j, k: (0, j)),    # b_h tile
                pl.BlockSpec((1, tn), lambda i, j, k: (0, j)),    # b_gate tile
            ],
            out_specs=pl.BlockSpec((tm, tn), lambda i, j, k: (i, j)),
            scratch_shapes=[pltpu.VMEM((tm, tn), jnp.float32),
                            pltpu.VMEM((tm, tn), jnp.float32)],
        ),
        compiler_params=_COMPILER_PARAMS,
        cost_estimate=cost,
    )(xp, whp, wgp, bhp, bgp)
    return out[:M, :d]


def feedforward(x, w1, b1, w2, b2, *, glu=False, compute_dtype=jnp.bfloat16):
    """FeedForward forward pass.

    x: (..., dim)
    glu=False: w1 (dim, inner), b1 (inner,)        -> GELU(x @ w1 + b1)
    glu=True : w1 (dim, 2*inner), b1 (2*inner,)    -> GEGLU
    w2: (inner, dim_out), b2: (dim_out,)
    """
    lead = x.shape[:-1]
    x2 = x.reshape(-1, x.shape[-1])
    if glu:
        h = geglu(x2, w1, b1, compute_dtype=compute_dtype)
    else:
        h = fused_linear(x2, w1, b1, activation="gelu",
                         compute_dtype=compute_dtype)
    # TODO(synk): Dropout with p > 0 would need pltpu.prng_*; module default
    # p=0.0 is the identity, so it is omitted here.
    out = fused_linear(h, w2, b2, activation=None, compute_dtype=compute_dtype)
    return out.reshape(*lead, w2.shape[1])


# ---------------------------------------------------------------------------
# Pure-JAX reference (mirrors the kernel's bf16-operand / f32-accumulate numerics)
# ---------------------------------------------------------------------------

def feedforward_ref(x, w1, b1, w2, b2, *, glu=False, compute_dtype=jnp.bfloat16):
    cd = compute_dtype

    def lin(a, w, b):
        return jnp.dot(a.astype(cd), w.astype(cd),
                       preferred_element_type=jnp.float32) + b.astype(jnp.float32)

    x2 = x.reshape(-1, x.shape[-1])
    if glu:
        y = lin(x2, w1, b1)
        d = y.shape[-1] // 2
        h = y[:, :d] * _gelu_f32(y[:, d:])
    else:
        h = _gelu_f32(lin(x2, w1, b1))
    h = h.astype(x.dtype)
    out = lin(h, w2, b2).astype(x.dtype)
    return out.reshape(*x.shape[:-1], w2.shape[1])


# ---------------------------------------------------------------------------
# Test
# ---------------------------------------------------------------------------

if __name__ == "__main__":
    key = jax.random.PRNGKey(0)
    B, S, dim, mult = 2, 8, 32, 4
    inner_dim = dim * mult          # 128
    dim_out = dim                   # FeedForward default: dim_out = dim

    kx, k1w, k1b, k2w, k2b, kgw, kgb = jax.random.split(key, 7)
    x = jax.random.normal(kx, (B, S, dim), dtype=jnp.float32)

    def init_linear(kw, kb, fan_in, fan_out):
        bound = 1.0 / (fan_in ** 0.5)
        w = jax.random.uniform(kw, (fan_in, fan_out), minval=-bound,
                               maxval=bound, dtype=jnp.float32)
        b = jax.random.uniform(kb, (fan_out,), minval=-bound,
                               maxval=bound, dtype=jnp.float32)
        return w, b

    # shared output projection Linear(inner_dim, dim_out)
    w2, b2 = init_linear(k2w, k2b, inner_dim, dim_out)

    # --- default FeedForward (glu=False): Linear -> GELU -> (Dropout p=0) -> Linear ---
    w1, b1 = init_linear(k1w, k1b, dim, inner_dim)
    out = jax.block_until_ready(feedforward(x, w1, b1, w2, b2, glu=False))
    ref = feedforward_ref(x, w1, b1, w2, b2, glu=False)
    assert out.shape == (B, S, dim_out)
    assert jnp.allclose(out, ref, atol=1e-2, rtol=1e-2), \
        float(jnp.max(jnp.abs(out - ref)))

    # --- glu=True FeedForward: GEGLU -> (Dropout p=0) -> Linear ---
    w1g, b1g = init_linear(kgw, kgb, dim, 2 * inner_dim)
    outg = jax.block_until_ready(feedforward(x, w1g, b1g, w2, b2, glu=True))
    refg = feedforward_ref(x, w1g, b1g, w2, b2, glu=True)
    assert outg.shape == (B, S, dim_out)
    assert jnp.allclose(outg, refg, atol=1e-2, rtol=1e-2), \
        float(jnp.max(jnp.abs(outg - refg)))

    print("KERNEL_OK")
</pallas_src>

<mosaic_0001>
module attributes {stable_mosaic.version = 11 : i64} {
  func.func @_linear_kernel(%arg0: i32, %arg1: i32, %arg2: i32, %arg3: memref<16x128xbf16, #tpu.memory_space<vmem>>, %arg4: memref<128x128xbf16, #tpu.memory_space<vmem>>, %arg5: memref<1x128xf32, #tpu.memory_space<vmem>>, %arg6: memref<16x128xf32, #tpu.memory_space<vmem>>, %arg7: memref<16x128xf32, #tpu.memory_space<vmem>>) attributes {dimension_semantics = [#tpu.dimension_semantics<parallel>, #tpu.dimension_semantics<parallel>, #tpu.dimension_semantics<arbitrary>], iteration_bounds = array<i64: 1, 1, 1>, scalar_prefetch = 0 : i64, scratch_operands = 1 : i64, tpu.core_type = #tpu.core_type<tc>, window_params = [{transform_indices = @transform_0, window_bounds = array<i64: 16, 128>}, {transform_indices = @transform_1, window_bounds = array<i64: 128, 128>}, {transform_indices = @transform_2, window_bounds = array<i64: 1, 128>}, {transform_indices = @transform_3, window_bounds = array<i64: 16, 128>}]} {
    %c0_i32 = arith.constant 0 : i32
    %0 = arith.cmpi eq, %arg2, %c0_i32 : i32
    %1 = arith.extui %0 : i1 to i32
    %c0_i32_0 = arith.constant 0 : i32
    %2 = arith.cmpi ne, %1, %c0_i32_0 : i32
    scf.if %2 {
      %c0_10 = arith.constant 0 : index
      %c0_11 = arith.constant 0 : index
      %12 = vector.load %arg5[%c0_10, %c0_11] : memref<1x128xf32, #tpu.memory_space<vmem>>, vector<1x128xf32>
      %13 = vector.shape_cast %12 : vector<1x128xf32> to vector<1x128xf32>
      %14 = vector.broadcast %13 : vector<1x128xf32> to vector<16x128xf32>
      %c0_12 = arith.constant 0 : index
      %c0_13 = arith.constant 0 : index
      %15 = vector.load %arg7[%c0_12, %c0_13] : memref<16x128xf32, #tpu.memory_space<vmem>>, vector<16x128xf32>
      tpu.vector_store %arg7[%c0_12, %c0_13], %14 {strides = array<i32>} : memref<16x128xf32, #tpu.memory_space<vmem>>, vector<16x128xf32>,
    } else {
    }
    %c0 = arith.constant 0 : index
    %c0_1 = arith.constant 0 : index
    %3 = vector.load %arg7[%c0, %c0_1] : memref<16x128xf32, #tpu.memory_space<vmem>>, vector<16x128xf32>
    %c0_2 = arith.constant 0 : index
    %c0_3 = arith.constant 0 : index
    %4 = vector.load %arg3[%c0_2, %c0_3] : memref<16x128xbf16, #tpu.memory_space<vmem>>, vector<16x128xbf16>
    %c0_4 = arith.constant 0 : index
    %c0_5 = arith.constant 0 : index
    %5 = vector.load %arg4[%c0_4, %c0_5] : memref<128x128xbf16, #tpu.memory_space<vmem>>, vector<128x128xbf16>
    %cst = arith.constant dense<0.000000e+00> : vector<16x128xf32>
    %6 = tpu.matmul %4, %5, %cst {dimension_numbers = #tpu.dot_dimension_numbers<[1], [0], [0], [1], [0, 0, 1, 1], [], []>} : vector<16x128xbf16>, vector<128x128xbf16>, vector<16x128xf32> -> vector<16x128xf32>
    %7 = arith.addf %3, %6 : vector<16x128xf32>
    %c0_6 = arith.constant 0 : index
    %c0_7 = arith.constant 0 : index
    %8 = vector.load %arg7[%c0_6, %c0_7] : memref<16x128xf32, #tpu.memory_space<vmem>>, vector<16x128xf32>
    tpu.vector_store %arg7[%c0_6, %c0_7], %7 {strides = array<i32>} : memref<16x128xf32, #tpu.memory_space<vmem>>, vector<16x128xf32>,
    %c0_i32_8 = arith.constant 0 : i32
    %9 = arith.cmpi eq, %arg2, %c0_i32_8 : i32
    %10 = arith.extui %9 : i1 to i32
    %c0_i32_9 = arith.constant 0 : i32
    %11 = arith.cmpi ne, %10, %c0_i32_9 : i32
    scf.if %11 {
      %c0_10 = arith.constant 0 : index
      %c0_11 = arith.constant 0 : index
      %12 = vector.load %arg7[%c0_10, %c0_11] : memref<16x128xf32, #tpu.memory_space<vmem>>, vector<16x128xf32>
      %cst_12 = arith.constant 5.000000e-01 : f32
      %13 = vector.broadcast %cst_12 : f32 to vector<16x128xf32>
      %14 = arith.mulf %13, %12 : vector<16x128xf32>
      %cst_13 = arith.constant 0.707106769 : f32
      %15 = vector.broadcast %cst_13 : f32 to vector<16x128xf32>
      %16 = arith.mulf %12, %15 : vector<16x128xf32>
      %17 = math.erf %16 : vector<16x128xf32>
      %cst_14 = arith.constant 1.000000e+00 : f32
      %18 = vector.broadcast %cst_14 : f32 to vector<16x128xf32>
      %19 = arith.addf %18, %17 : vector<16x128xf32>
      %20 = arith.mulf %14, %19 : vector<16x128xf32>
      %c0_15 = arith.constant 0 : index
      %c0_16 = arith.constant 0 : index
      %21 = vector.load %arg6[%c0_15, %c0_16] : memref<16x128xf32, #tpu.memory_space<vmem>>, vector<16x128xf32>
      tpu.vector_store %arg6[%c0_15, %c0_16], %20 {strides = array<i32>} : memref<16x128xf32, #tpu.memory_space<vmem>>, vector<16x128xf32>,
    } else {
    }
    return
  }
  func.func @transform_0(%arg0: i32, %arg1: i32, %arg2: i32) -> (i32, i32) {
    %c0_i32 = arith.constant 0 : i32
    return %arg0, %arg2 : i32, i32
  }
  func.func @transform_1(%arg0: i32, %arg1: i32, %arg2: i32) -> (i32, i32) {
    %c0_i32 = arith.constant 0 : i32
    return %arg2, %arg1 : i32, i32
  }
  func.func @transform_2(%arg0: i32, %arg1: i32, %arg2: i32) -> (i32, i32) {
    %c0_i32 = arith.constant 0 : i32
    %c0_i32_0 = arith.constant 0 : i32
    return %c0_i32, %arg1 : i32, i32
  }
  func.func @transform_3(%arg0: i32, %arg1: i32, %arg2: i32) -> (i32, i32) {
    %c0_i32 = arith.constant 0 : i32
    return %arg0, %arg1 : i32, i32
  }
}

</mosaic_0001>

<llo_original>
// kernel: tpu_custom_call.1
$region0: #{tpu_custom_call.1}
  #allocation0 [shape = 'u32[]', space=smem, size = 0x4, offset = 0x4, fixed_abs, tag = 'smem constant byte address 0x4 - core index']
  #allocation1 [shape = 'u32[144,128]{1,0:T(1,128)}', space=vmem, size = 0x12000, scoped, tag = 'internal scratch']
  #allocation2 [shape = 'f32[16,128]{1,0:T(8,128)}', space=vmem, size = 0x2000, scoped, tag = 'scratch operand']
  %s0 = inlined_call_operand.hbm [shape: bf16[16,128], index: 0, kind: input, shape index: {}]
  %s1 = inlined_call_operand.hbm [shape: bf16[128,128], index: 1, kind: input, shape index: {}]
  %s2 = inlined_call_operand.vmem [shape: f32[1,128], index: 2, kind: input, shape index: {}]
  %s3 = inlined_call_operand.hbm [shape: f32[16,128], index: 3, kind: output, shape index: {}]
  %s4 = sld [smem:[#allocation0]]
  $region38: #{tpu_custom_call.1} parent=0
    _
  %s6 = ssub.s32 1, %s4
  %s7 = scalar_select 0, %s6, %s4
  $region1: #{tpu_custom_call.1} parent=0
    #allocation3 [shape = 'u8[4096]{0}', space=vmem, size = 0x1000, scoped, tag = 'input window, operand 0, single buffered']
    #allocation4 [shape = 's32[1]{0}', space=sflag, size = 0x4, scoped, tag = 'scoped memory for tpu_custom_call.1']
    #allocation5 [shape = 's32[1]{0}', space=sflag, size = 0x4, scoped, tag = 'scoped memory for tpu_custom_call.1']
    #allocation6 [shape = 'u8[32768]{0}', space=vmem, size = 0x8000, scoped, tag = 'input window, operand 1, single buffered']
    #allocation7 [shape = 's32[1]{0}', space=sflag, size = 0x4, scoped, tag = 'scoped memory for tpu_custom_call.1']
    #allocation8 [shape = 'u8[8192]{0}', space=vmem, size = 0x2000, scoped, tag = 'output window, operand 0, single buffered']
    %8 = vsyncpa [#allocation4], 0
    %9 = vsyncpa [#allocation7], 0
    %10 = vsyncpa [#allocation5], 0
    // Predicated region
    $region2: #{tpu_custom_call.1} parent=1 // pred_check
      _
    $region3: #{tpu_custom_call.1} parent=1 // pred_check_branch
      %12 = sbr.rel (0) target = $region5
    $region4: #{tpu_custom_call.1} parent=1 // pred_region
      %s14 = ssub.s32 128, 128
      %15 = vsyncadd [#allocation4], %s14
      %s16 = sshll.u32 [#allocation3], 4
      %s17 = int_to_ptr.vmem [resolvable:$true] %s16
      %22 = dma.hbm_to_vmem [thread:$0]  %s0, 128, %s17, [#allocation4], 64, 64, 4
    $region5: #{tpu_custom_call.1} parent=1 // pred_fallthru
      _
    // Predicated region
    $region6: #{tpu_custom_call.1} parent=1 // pred_check
      _
    $region7: #{tpu_custom_call.1} parent=1 // pred_check_branch
      %24 = sbr.rel (0) target = $region9
    $region8: #{tpu_custom_call.1} parent=1 // pred_region
      %s26 = ssub.s32 1024, 1024
      %27 = vsyncadd [#allocation7], %s26
      %s28 = sshll.u32 [#allocation6], 4
      %s29 = int_to_ptr.vmem [resolvable:$true] %s28
      %34 = dma.hbm_to_vmem [thread:$0]  %s1, 1024, %s29, [#allocation7], 64, 64, 4
    $region9: #{tpu_custom_call.1} parent=1 // pred_fallthru
      _
    // Predicated region
    $region10: #{tpu_custom_call.1} parent=1 // pred_check
      _
    $region11: #{tpu_custom_call.1} parent=1 // pred_check_branch
      %36 = sbr.rel (0) target = $region13
    $region12: #{tpu_custom_call.1} parent=1 // pred_region
      _
    $region13: #{tpu_custom_call.1} parent=1 // pred_fallthru
      _
    // Predicated region
    $region14: #{tpu_custom_call.1} parent=1 // pred_check
      _
    $region15: #{tpu_custom_call.1} parent=1 // pred_check_branch
      %38 = sbr.rel (0) target = $region17
    $region16: #{tpu_custom_call.1} parent=1 // pred_region
      %39 = dma.done [#allocation4], 128
    $region17: #{tpu_custom_call.1} parent=1 // pred_fallthru
      _
    // Predicated region
    $region18: #{tpu_custom_call.1} parent=1 // pred_check
      _
    $region19: #{tpu_custom_call.1} parent=1 // pred_check_branch
      %41 = sbr.rel (0) target = $region21
    $region20: #{tpu_custom_call.1} parent=1 // pred_region
      %42 = dma.done [#allocation7], 1024
    $region21: #{tpu_custom_call.1} parent=1 // pred_fallthru
      _
    %p44 = scmp.eq.s32.totalorder 0, 0
    // Predicated region
    $region22: #{tpu_custom_call.1} parent=1 // pred_check
      %p45 = pneg %p44
    $region23: #{tpu_custom_call.1} parent=1 // pred_check_branch
      %47 = sbr.rel (%p45) target = $region25
    $region24: #{tpu_custom_call.1} parent=1 // pred_region
      %v48 = vld [vmem:[%s2] sm:$0x1]
      %v50 = vlaneseq
      %v51 = vshrl.u32 %v50, 7
      %v52 = vsub.s32 0, %v51
      %v53 = vrot.slane %v48, %v52
      %55 = vst [vmem:[#allocation2] sm:$0xff] %v53
      %56 = vst [vmem:[#allocation2 + $0x8] sm:$0xff] %v53
    $region25: #{tpu_custom_call.1} parent=1 // pred_fallthru
      _
    %v57 = vld [vmem:[#allocation2] sm:$0xff]
    %v58 = vld [vmem:[#allocation2 + $0x8] sm:$0xff]
    %v59 = vld [vmem:[#allocation3] sm:$0xf]
    %v60 = vld [vmem:[#allocation3 + $0x4] sm:$0xf]
    %v61 = vld [vmem:[#allocation6] sm:$0xf]
    %v62 = vld [vmem:[#allocation6 + $0x4] sm:$0xf]
    %v63 = vld [vmem:[#allocation6 + $0x8] sm:$0xf]
    %v64 = vld [vmem:[#allocation6 + $0xc] sm:$0xf]
    %v65 = vld [vmem:[#allocation6 + $0x10] sm:$0xf]
    %v66 = vld [vmem:[#allocation6 + $0x14] sm:$0xf]
    %v67 = vld [vmem:[#allocation6 + $0x18] sm:$0xf]
    %v68 = vld [vmem:[#allocation6 + $0x1c] sm:$0xf]
    %v69 = vld [vmem:[#allocation6 + $0x20] sm:$0xf]
    %v70 = vld [vmem:[#allocation6 + $0x24] sm:$0xf]
    %v71 = vld [vmem:[#allocation6 + $0x28] sm:$0xf]
    %v72 = vld [vmem:[#allocation6 + $0x2c] sm:$0xf]
    %v73 = vld [vmem:[#allocation6 + $0x30] sm:$0xf]
    %v74 = vld [vmem:[#allocation6 + $0x34] sm:$0xf]
    %v75 = vld [vmem:[#allocation6 + $0x38] sm:$0xf]
    %v76 = vld [vmem:[#allocation6 + $0x3c] sm:$0xf]
    %v79 = vunpack.c.l.b16 %v59
    %v80 = vunpack.c.l.b16 %v60
    %v81 = vpack.c.b16 %v80, %v79
    %v99 = vunpack.c.l.b16 %v61
    %v100 = vunpack.c.l.b16 %v62
    %v101 = vunpack.c.l.b16 %v63
    %v102 = vunpack.c.l.b16 %v64
    %v103 = vunpack.c.l.b16 %v65
    %v104 = vunpack.c.l.b16 %v66
    %v105 = vunpack.c.l.b16 %v67
    %v106 = vunpack.c.l.b16 %v68
    %v107 = vunpack.c.l.b16 %v69
    %v108 = vunpack.c.l.b16 %v70
    %v109 = vunpack.c.l.b16 %v71
    %v110 = vunpack.c.l.b16 %v72
    %v111 = vunpack.c.l.b16 %v73
    %v112 = vunpack.c.l.b16 %v74
    %v113 = vunpack.c.l.b16 %v75
    %v114 = vunpack.c.l.b16 %v76
    %v115 = vpack.c.b16 %v100, %v99
    %v116 = vpack.c.b16 %v102, %v101
    %v117 = vpack.c.b16 %v104, %v103
    %v118 = vpack.c.b16 %v106, %v105
    %v119 = vpack.c.b16 %v108, %v107
    %v120 = vpack.c.b16 %v110, %v109
    %v121 = vpack.c.b16 %v112, %v111
    %v122 = vpack.c.b16 %v114, %v113
    %131 = vmatprep.subr.bf16.mxu0 0
    %132 = vmatpush1.bf16.msra.mxu0 %v122
    %133 = vmatprep.subr.bf16.mxu0 0
    %134 = vmatpush1.bf16.msra.mxu0 %v121
    %135 = vmatprep.subr.bf16.mxu0 0
    %136 = vmatpush1.bf16.msra.mxu0 %v120
    %137 = vmatprep.subr.bf16.mxu0 0
    %138 = vmatpush1.bf16.msra.mxu0 %v119
    %139 = vmatprep.subr.bf16.mxu0 0
    %140 = vmatpush1.bf16.msra.mxu0 %v118
    %141 = vmatprep.subr.bf16.mxu0 0
    %142 = vmatpush1.bf16.msra.mxu0 %v117
    %143 = vmatprep.subr.bf16.mxu0 0
    %144 = vmatpush1.bf16.msra.mxu0 %v116
    %145 = vmatprep.subr.bf16.mxu0 0
    %146 = vmatpush1.bf16.msra.mxu0 %v115
    %147 = vmatprep.subr.bf16.mxu0 0
    %148 = vmatpush2.bf16.msra.mxu0 0
    %149 = vmatprep.subr.bf16.mxu0 0
    %150 = vmatpush2.bf16.msra.mxu0 0
    %151 = vmatprep.subr.bf16.mxu0 0
    %152 = vmatpush2.bf16.msra.mxu0 0
    %153 = vmatprep.subr.bf16.mxu0 0
    %154 = vmatpush2.bf16.msra.mxu0 0
    %155 = vmatprep.subr.bf16.mxu0 0
    %156 = vmatpush2.bf16.msra.mxu0 0
    %157 = vmatprep.subr.bf16.mxu0 0
    %158 = vmatpush2.bf16.msra.mxu0 0
    %159 = vmatprep.subr.bf16.mxu0 0
    %160 = vmatpush2.bf16.msra.mxu0 0
    %161 = vmatprep.subr.bf16.mxu0 0
    %162 = vmatpush2.bf16.msra.mxu0 0
    %163 = vmatprep.mubr.bf16.mxu0 0
    %164 = vmatmul.mubr.bf16.gmra.mxu0 %v81
    %v165 = vpop.f32.mrf.mxu0
    %v166 = vadd.f32 0.0, %v165
    %v167 = vpop.f32.mrf.mxu0
    %v168 = vpop.f32.mrf.mxu0
    %v169 = vadd.f32 0.0, %v168
    %v170 = vpop.f32.mrf.mxu0
    %171 = vdwg.mxu0
    %v172 = vadd.f32 %v57, %v166
    %v173 = vadd.f32 %v58, %v169
    %174 = vst [vmem:[#allocation2] sm:$0xff] %v172
    %175 = vst [vmem:[#allocation2 + $0x8] sm:$0xff] %v173
    // Predicated region
    $region26: #{tpu_custom_call.1} parent=1 // pred_check
      %p176 = pneg %p44
    $region27: #{tpu_custom_call.1} parent=1 // pred_check_branch
      %178 = sbr.rel (%p176) target = $region29
    $region28: #{tpu_custom_call.1} parent=1 // pred_region
      %v179 = vld [vmem:[#allocation2] sm:$0xff]
      %v180 = vld [vmem:[#allocation2 + $0x8] sm:$0xff]
      %v181 = vmul.f32 %v179, 0.5
      %v182 = vmul.f32 %v180, 0.5
      %v183 = vmul.f32 %v179, 0.70710677
      %v184 = vmul.f32 %v180, 0.70710677
      %v185 = verf.f32.pop %v183
      %v186 = verf.f32.pop %v184
      %v187 = vadd.f32 %v185, 1.0
      %v188 = vadd.f32 %v186, 1.0
      %v189 = vmul.f32 %v181, %v187
      %v190 = vmul.f32 %v182, %v188
      %191 = vst [vmem:[#allocation8] sm:$0xff] %v189
      %192 = vst [vmem:[#allocation8 + $0x8] sm:$0xff] %v190
    $region29: #{tpu_custom_call.1} parent=1 // pred_fallthru
      _
    // Predicated region
    $region30: #{tpu_custom_call.1} parent=1 // pred_check
      _
    $region31: #{tpu_custom_call.1} parent=1 // pred_check_branch
      %194 = sbr.rel (0) target = $region33
    $region32: #{tpu_custom_call.1} parent=1 // pred_region
      %s196 = ssub.s32 256, 256
      %197 = vsyncadd [#allocation5], %s196
      %s198 = sshll.u32 [#allocation8], 4
      %s199 = int_to_ptr.vmem [resolvable:$true] %s198
      %204 = dma.vmem_to_hbm [thread:$0]  %s199, 256, %s3, [#allocation5], 128, 128, 8
    $region33: #{tpu_custom_call.1} parent=1 // pred_fallthru
      _
    // Predicated region
    $region34: #{tpu_custom_call.1} parent=1 // pred_check
      _
    $region35: #{tpu_custom_call.1} parent=1 // pred_check_branch
      %206 = sbr.rel (0) target = $region37
    $region36: #{tpu_custom_call.1} parent=1 // pred_region
      %207 = dma.done [#allocation5], 256
    $region37: #{tpu_custom_call.1} parent=1 // pred_fallthru
      _
    %208 = vsyncpa [#allocation4], 1
    %209 = vsyncpa [#allocation7], 1
    %210 = vsyncpa [#allocation5], 1

</llo_original>
